<compile_context>
chip_gen: v6e
topology: v6e:2x2x1
jax: 0.10.0
libtpu: 0.0.40
codegen_flags: <defaults>
</compile_context>

<pallas_src>
import jax
import jax.numpy as jnp
from jax.experimental import pallas as pl
from jax.experimental.pallas import tpu as pltpu

IN_F, H1, H2, OUT_F = 20, 64, 128, 4


def _round_up(n, m):
    return ((n + m - 1) // m) * m


def mlp_kernel(x_ref, w1_ref, b1_ref, w2_ref, b2_ref, w3_ref, b3_ref, o_ref):
    # Feature-major tiles: x is (IN_F, TB), output is (OUT_F, TB).
    # bf16 operands, f32 MXU accumulation; bias-add + ReLU in f32.
    x = x_ref[...]                                                     # (20, TB) bf16
    h = jnp.dot(w1_ref[...], x, preferred_element_type=jnp.float32) + b1_ref[...]
    h = jnp.maximum(h, 0.0).astype(jnp.bfloat16)                       # dropout == identity (eval)
    h = jnp.dot(w2_ref[...], h, preferred_element_type=jnp.float32) + b2_ref[...]
    h = jnp.maximum(h, 0.0).astype(jnp.bfloat16)                       # dropout == identity (eval)
    o_ref[...] = (jnp.dot(w3_ref[...], h, preferred_element_type=jnp.float32)
                  + b3_ref[...]).astype(o_ref.dtype)


def mlp_forward(x, w1, b1, w2, b2, w3, b3, *, tb=8192):
    """x: (B, 20) f32.  Weights PyTorch-layout (out, in) f32, biases (out, 1) f32.
    Returns (B, 4) f32 logits."""
    B = x.shape[0]

    # Batch tile: multiple of 128 (batch maps to the lane axis in the transposed
    # layout).  Cap at ceil(B/2) rounded up so the grid keeps >=2 steps when
    # possible (v7x megacore sharding); never below 128.
    TB = min(tb, _round_up(max((B + 1) // 2, 1), 128))
    TB = max(TB, 128)
    B_pad = _round_up(B, TB)

    # Feature-major (lane-dense) input slab: (IN_F, B_pad) bf16.
    xt = x.T.astype(jnp.bfloat16)
    if B_pad != B:
        xt = jnp.pad(xt, ((0, 0), (0, B_pad - B)))

    # bf16 weights, f32 biases (column vectors broadcast along the lane axis).
    w1b = w1.astype(jnp.bfloat16)
    w2b = w2.astype(jnp.bfloat16)
    w3b = w3.astype(jnp.bfloat16)

    grid = (pl.cdiv(B_pad, TB),)
    const2d = lambda i: (0, 0)

    flops = 2 * B_pad * (IN_F * H1 + H1 * H2 + H2 * OUT_F)
    bytes_accessed = (B_pad * (IN_F * 2 + OUT_F * 4)
                      + 2 * (IN_F * H1 + H1 * H2 + H2 * OUT_F)
                      + 4 * (H1 + H2 + OUT_F))

    out_t = pl.pallas_call(
        mlp_kernel,
        out_shape=jax.ShapeDtypeStruct((OUT_F, B_pad), jnp.float32),
        grid=grid,
        in_specs=[
            pl.BlockSpec((IN_F, TB), lambda i: (0, i)),      # x tile (streams along batch/lanes)
            pl.BlockSpec((H1, IN_F), const2d),               # W1 resident
            pl.BlockSpec((H1, 1), const2d),                  # b1
            pl.BlockSpec((H2, H1), const2d),                 # W2
            pl.BlockSpec((H2, 1), const2d),                  # b2
            pl.BlockSpec((OUT_F, H2), const2d),              # W3
            pl.BlockSpec((OUT_F, 1), const2d),               # b3
        ],
        out_specs=pl.BlockSpec((OUT_F, TB), lambda i: (0, i)),
        compiler_params=pltpu.CompilerParams(
            dimension_semantics=("parallel",),
            vmem_limit_bytes=48 * 1024 * 1024,
        ),
        cost_estimate=pl.CostEstimate(
            flops=int(flops), transcendentals=0, bytes_accessed=int(bytes_accessed)),
    )(xt, w1b, b1, w2b, b2, w3b, b3)

    # Back to batch-major; drop padded columns.
    return out_t[:, :B].T


def init_params(key):
    """Deterministic synthetic params matching nn.Linear shapes: W (out, in), b (out, 1)."""
    ks = jax.random.split(key, 6)
    w1 = jax.random.normal(ks[0], (H1, IN_F), jnp.float32) * 0.1
    b1 = jax.random.normal(ks[1], (H1, 1), jnp.float32) * 0.1
    w2 = jax.random.normal(ks[2], (H2, H1), jnp.float32) * 0.1
    b2 = jax.random.normal(ks[3], (H2, 1), jnp.float32) * 0.1
    w3 = jax.random.normal(ks[4], (OUT_F, H2), jnp.float32) * 0.1
    b3 = jax.random.normal(ks[5], (OUT_F, 1), jnp.float32) * 0.1
    return w1, b1, w2, b2, w3, b3


def reference_forward(x, w1, b1, w2, b2, w3, b3):
    """Batch-major reference mirroring the kernel's bf16-data / f32-accumulate path."""
    xb = x.astype(jnp.bfloat16)
    h = jnp.dot(xb, w1.astype(jnp.bfloat16).T, preferred_element_type=jnp.float32) + b1.T
    h = jnp.maximum(h, 0.0).astype(jnp.bfloat16)
    h = jnp.dot(h, w2.astype(jnp.bfloat16).T, preferred_element_type=jnp.float32) + b2.T
    h = jnp.maximum(h, 0.0).astype(jnp.bfloat16)
    return jnp.dot(h, w3.astype(jnp.bfloat16).T, preferred_element_type=jnp.float32) + b3.T


if __name__ == "__main__":
    key = jax.random.PRNGKey(0)
    kx, kp = jax.random.split(key)
    B = 8
    x = jax.random.normal(kx, (B, IN_F), jnp.float32)
    params = init_params(kp)

    out = mlp_forward(x, *params)
    out = jax.block_until_ready(out)

    ref = reference_forward(x, *params)
    assert out.shape == (B, OUT_F), out.shape
    assert jnp.allclose(out, ref, atol=1e-2, rtol=1e-2), "mismatch vs reference"

    print("KERNEL_OK")
</pallas_src>

<mosaic_0001>
module attributes {stable_mosaic.version = 11 : i64} {
  func.func @mlp_kernel(%arg0: i32, %arg1: memref<20x128xbf16, #tpu.memory_space<vmem>>, %arg2: memref<64x20xbf16, #tpu.memory_space<vmem>>, %arg3: memref<64x1xf32, #tpu.memory_space<vmem>>, %arg4: memref<128x64xbf16, #tpu.memory_space<vmem>>, %arg5: memref<128x1xf32, #tpu.memory_space<vmem>>, %arg6: memref<4x128xbf16, #tpu.memory_space<vmem>>, %arg7: memref<4x1xf32, #tpu.memory_space<vmem>>, %arg8: memref<4x128xf32, #tpu.memory_space<vmem>>) attributes {dimension_semantics = [#tpu.dimension_semantics<parallel>], iteration_bounds = array<i64: 1>, scalar_prefetch = 0 : i64, scratch_operands = 0 : i64, tpu.core_type = #tpu.core_type<tc>, window_params = [{transform_indices = @transform_0, window_bounds = array<i64: 20, 128>}, {pipeline_mode = #tpu.pipeline_mode<synchronous>, transform_indices = @transform_1, window_bounds = array<i64: 64, 20>}, {pipeline_mode = #tpu.pipeline_mode<synchronous>, transform_indices = @transform_2, window_bounds = array<i64: 64, 1>}, {pipeline_mode = #tpu.pipeline_mode<synchronous>, transform_indices = @transform_3, window_bounds = array<i64: 128, 64>}, {pipeline_mode = #tpu.pipeline_mode<synchronous>, transform_indices = @transform_4, window_bounds = array<i64: 128, 1>}, {pipeline_mode = #tpu.pipeline_mode<synchronous>, transform_indices = @transform_5, window_bounds = array<i64: 4, 128>}, {pipeline_mode = #tpu.pipeline_mode<synchronous>, transform_indices = @transform_6, window_bounds = array<i64: 4, 1>}, {transform_indices = @transform_7, window_bounds = array<i64: 4, 128>}]} {
    %c0 = arith.constant 0 : index
    %c0_0 = arith.constant 0 : index
    %0 = vector.load %arg1[%c0, %c0_0] : memref<20x128xbf16, #tpu.memory_space<vmem>>, vector<20x128xbf16>
    %c0_1 = arith.constant 0 : index
    %c0_2 = arith.constant 0 : index
    %1 = vector.load %arg2[%c0_1, %c0_2] : memref<64x20xbf16, #tpu.memory_space<vmem>>, vector<64x20xbf16>
    %cst = arith.constant dense<0.000000e+00> : vector<64x128xf32>
    %2 = tpu.matmul %1, %0, %cst {dimension_numbers = #tpu.dot_dimension_numbers<[1], [0], [0], [1], [0, 0, 1, 1], [], []>} : vector<64x20xbf16>, vector<20x128xbf16>, vector<64x128xf32> -> vector<64x128xf32>
    %c0_3 = arith.constant 0 : index
    %c0_4 = arith.constant 0 : index
    %3 = vector.load %arg3[%c0_3, %c0_4] : memref<64x1xf32, #tpu.memory_space<vmem>>, vector<64x1xf32>
    %4 = vector.broadcast %3 : vector<64x1xf32> to vector<64x128xf32>
    %5 = arith.addf %2, %4 : vector<64x128xf32>
    %cst_5 = arith.constant 0.000000e+00 : f32
    %6 = vector.broadcast %cst_5 : f32 to vector<64x128xf32>
    %7 = arith.maximumf %5, %6 : vector<64x128xf32>
    %8 = arith.truncf %7 : vector<64x128xf32> to vector<64x128xbf16>
    %c0_6 = arith.constant 0 : index
    %c0_7 = arith.constant 0 : index
    %9 = vector.load %arg4[%c0_6, %c0_7] : memref<128x64xbf16, #tpu.memory_space<vmem>>, vector<128x64xbf16>
    %cst_8 = arith.constant dense<0.000000e+00> : vector<128x128xf32>
    %10 = tpu.matmul %9, %8, %cst_8 {dimension_numbers = #tpu.dot_dimension_numbers<[1], [0], [0], [1], [0, 0, 1, 1], [], []>} : vector<128x64xbf16>, vector<64x128xbf16>, vector<128x128xf32> -> vector<128x128xf32>
    %c0_9 = arith.constant 0 : index
    %c0_10 = arith.constant 0 : index
    %11 = vector.load %arg5[%c0_9, %c0_10] : memref<128x1xf32, #tpu.memory_space<vmem>>, vector<128x1xf32>
    %12 = vector.broadcast %11 : vector<128x1xf32> to vector<128x128xf32>
    %13 = arith.addf %10, %12 : vector<128x128xf32>
    %cst_11 = arith.constant 0.000000e+00 : f32
    %14 = vector.broadcast %cst_11 : f32 to vector<128x128xf32>
    %15 = arith.maximumf %13, %14 : vector<128x128xf32>
    %16 = arith.truncf %15 : vector<128x128xf32> to vector<128x128xbf16>
    %c0_12 = arith.constant 0 : index
    %c0_13 = arith.constant 0 : index
    %17 = vector.load %arg6[%c0_12, %c0_13] : memref<4x128xbf16, #tpu.memory_space<vmem>>, vector<4x128xbf16>
    %cst_14 = arith.constant dense<0.000000e+00> : vector<4x128xf32>
    %18 = tpu.matmul %17, %16, %cst_14 {dimension_numbers = #tpu.dot_dimension_numbers<[1], [0], [0], [1], [0, 0, 1, 1], [], []>} : vector<4x128xbf16>, vector<128x128xbf16>, vector<4x128xf32> -> vector<4x128xf32>
    %c0_15 = arith.constant 0 : index
    %c0_16 = arith.constant 0 : index
    %19 = vector.load %arg7[%c0_15, %c0_16] : memref<4x1xf32, #tpu.memory_space<vmem>>, vector<4x1xf32>
    %20 = vector.broadcast %19 : vector<4x1xf32> to vector<4x128xf32>
    %21 = arith.addf %18, %20 : vector<4x128xf32>
    %c0_17 = arith.constant 0 : index
    %c0_18 = arith.constant 0 : index
    %22 = vector.load %arg8[%c0_17, %c0_18] : memref<4x128xf32, #tpu.memory_space<vmem>>, vector<4x128xf32>
    tpu.vector_store %arg8[%c0_17, %c0_18], %21 {strides = array<i32>} : memref<4x128xf32, #tpu.memory_space<vmem>>, vector<4x128xf32>,
    return
  }
  func.func @transform_0(%arg0: i32) -> (i32, i32) {
    %c0_i32 = arith.constant 0 : i32
    %c0_i32_0 = arith.constant 0 : i32
    return %c0_i32, %arg0 : i32, i32
  }
  func.func @transform_1(%arg0: i32) -> (i32, i32) {
    %c0_i32 = arith.constant 0 : i32
    %c0_i32_0 = arith.constant 0 : i32
    %c0_i32_1 = arith.constant 0 : i32
    return %c0_i32, %c0_i32_0 : i32, i32
  }
  func.func @transform_2(%arg0: i32) -> (i32, i32) {
    %c0_i32 = arith.constant 0 : i32
    %c0_i32_0 = arith.constant 0 : i32
    %c0_i32_1 = arith.constant 0 : i32
    return %c0_i32, %c0_i32_0 : i32, i32
  }
  func.func @transform_3(%arg0: i32) -> (i32, i32) {
    %c0_i32 = arith.constant 0 : i32
    %c0_i32_0 = arith.constant 0 : i32
    %c0_i32_1 = arith.constant 0 : i32
    return %c0_i32, %c0_i32_0 : i32, i32
  }
  func.func @transform_4(%arg0: i32) -> (i32, i32) {
    %c0_i32 = arith.constant 0 : i32
    %c0_i32_0 = arith.constant 0 : i32
    %c0_i32_1 = arith.constant 0 : i32
    return %c0_i32, %c0_i32_0 : i32, i32
  }
  func.func @transform_5(%arg0: i32) -> (i32, i32) {
    %c0_i32 = arith.constant 0 : i32
    %c0_i32_0 = arith.constant 0 : i32
    %c0_i32_1 = arith.constant 0 : i32
    return %c0_i32, %c0_i32_0 : i32, i32
  }
  func.func @transform_6(%arg0: i32) -> (i32, i32) {
    %c0_i32 = arith.constant 0 : i32
    %c0_i32_0 = arith.constant 0 : i32
    %c0_i32_1 = arith.constant 0 : i32
    return %c0_i32, %c0_i32_0 : i32, i32
  }
  func.func @transform_7(%arg0: i32) -> (i32, i32) {
    %c0_i32 = arith.constant 0 : i32
    %c0_i32_0 = arith.constant 0 : i32
    return %c0_i32, %arg0 : i32, i32
  }
}

</mosaic_0001>

<llo_original>
// kernel: tpu_custom_call.1
$region0: #{tpu_custom_call.1}
  #allocation0 [shape = 'u32[]', space=smem, size = 0x4, offset = 0x4, fixed_abs, tag = 'smem constant byte address 0x4 - core index']
  #allocation1 [shape = 'u32[144,128]{1,0:T(1,128)}', space=vmem, size = 0x12000, scoped, tag = 'internal scratch']
  %s0 = inlined_call_operand.vmem [shape: bf16[20,128], index: 0, kind: input, shape index: {}]
  %s1 = inlined_call_operand.vmem [shape: bf16[64,20], index: 1, kind: input, shape index: {}]
  %s2 = inlined_call_operand.vmem [shape: f32[64,1], index: 2, kind: input, shape index: {}]
  %s3 = inlined_call_operand.vmem [shape: bf16[128,64], index: 3, kind: input, shape index: {}]
  %s4 = inlined_call_operand.vmem [shape: f32[128,1], index: 4, kind: input, shape index: {}]
  %s5 = inlined_call_operand.vmem [shape: bf16[4,128], index: 5, kind: input, shape index: {}]
  %s6 = inlined_call_operand.vmem [shape: f32[4,1], index: 6, kind: input, shape index: {}]
  %s7 = inlined_call_operand.hbm [shape: f32[4,128], index: 7, kind: output, shape index: {}]
  %s8 = sld [smem:[#allocation0]]
  $region38: #{tpu_custom_call.1} parent=0
    _
  %s10 = ssub.s32 1, %s8
  %s11 = scalar_select 0, %s10, %s8
  $region1: #{tpu_custom_call.1} parent=0
    #allocation2 [shape = 'u8[2048]{0}', space=vmem, size = 0x800, scoped, tag = 'output window, operand 0, single buffered']
    #allocation3 [shape = 's32[1]{0}', space=sflag, size = 0x4, scoped, tag = 'scoped memory for tpu_custom_call.1']
    %12 = vsyncpa [#allocation3], 0
    // Predicated region
    $region2: #{tpu_custom_call.1} parent=1 // pred_check
      _
    $region3: #{tpu_custom_call.1} parent=1 // pred_check_branch
      %14 = sbr.rel (0) target = $region5
    $region4: #{tpu_custom_call.1} parent=1 // pred_region
      _
    $region5: #{tpu_custom_call.1} parent=1 // pred_fallthru
      _
    // Predicated region
    $region6: #{tpu_custom_call.1} parent=1 // pred_check
      _
    $region7: #{tpu_custom_call.1} parent=1 // pred_check_branch
      %16 = sbr.rel (0) target = $region9
    $region8: #{tpu_custom_call.1} parent=1 // pred_region
      _
    $region9: #{tpu_custom_call.1} parent=1 // pred_fallthru
      _
    // Predicated region
    $region10: #{tpu_custom_call.1} parent=1 // pred_check
      _
    $region11: #{tpu_custom_call.1} parent=1 // pred_check_branch
      %18 = sbr.rel (0) target = $region13
    $region12: #{tpu_custom_call.1} parent=1 // pred_region
      _
    $region13: #{tpu_custom_call.1} parent=1 // pred_fallthru
      _
    // Predicated region
    $region14: #{tpu_custom_call.1} parent=1 // pred_check
      _
    $region15: #{tpu_custom_call.1} parent=1 // pred_check_branch
      %20 = sbr.rel (0) target = $region17
    $region16: #{tpu_custom_call.1} parent=1 // pred_region
      _
    $region17: #{tpu_custom_call.1} parent=1 // pred_fallthru
      _
    // Predicated region
    $region18: #{tpu_custom_call.1} parent=1 // pred_check
      _
    $region19: #{tpu_custom_call.1} parent=1 // pred_check_branch
      %22 = sbr.rel (0) target = $region21
    $region20: #{tpu_custom_call.1} parent=1 // pred_region
      _
    $region21: #{tpu_custom_call.1} parent=1 // pred_fallthru
      _
    // Predicated region
    $region22: #{tpu_custom_call.1} parent=1 // pred_check
      _
    $region23: #{tpu_custom_call.1} parent=1 // pred_check_branch
      %24 = sbr.rel (0) target = $region25
    $region24: #{tpu_custom_call.1} parent=1 // pred_region
      _
    $region25: #{tpu_custom_call.1} parent=1 // pred_fallthru
      _
    // Predicated region
    $region26: #{tpu_custom_call.1} parent=1 // pred_check
      _
    $region27: #{tpu_custom_call.1} parent=1 // pred_check_branch
      %26 = sbr.rel (0) target = $region29
    $region28: #{tpu_custom_call.1} parent=1 // pred_region
      _
    $region29: #{tpu_custom_call.1} parent=1 // pred_fallthru
      _
    %v28 = vld [vmem:[%s0] sm:$0xf]
    %v29 = vld [vmem:[%s0 + $0x4] sm:$0xf]
    %v30 = vld [vmem:[%s0 + $0x8] sm:$0x3]
    %v31 = vld [vmem:[%s1] sm:$0xf]
    %v32 = vld [vmem:[%s1 + $0x4] sm:$0xf]
    %v33 = vld [vmem:[%s1 + $0x8] sm:$0xf]
    %v34 = vld [vmem:[%s1 + $0xc] sm:$0xf]
    %v35 = vld [vmem:[%s1 + $0x10] sm:$0xf]
    %v36 = vld [vmem:[%s1 + $0x14] sm:$0xf]
    %v37 = vld [vmem:[%s1 + $0x18] sm:$0xf]
    %v38 = vld [vmem:[%s1 + $0x1c] sm:$0xf]
    %v39 = vld [vmem:[%s2] sm:$0xff]
    %v40 = vld [vmem:[%s2 + $0x8] sm:$0xff]
    %v41 = vld [vmem:[%s2 + $0x10] sm:$0xff]
    %v42 = vld [vmem:[%s2 + $0x18] sm:$0xff]
    %v43 = vld [vmem:[%s2 + $0x20] sm:$0xff]
    %v44 = vld [vmem:[%s2 + $0x28] sm:$0xff]
    %v45 = vld [vmem:[%s2 + $0x30] sm:$0xff]
    %v46 = vld [vmem:[%s2 + $0x38] sm:$0xff]
    %48 = vset.pattern.permute.xlu0 0
    %49 = vperm.xlu0 %48, %v39
    %v50 = vpop.permute.xlu0 %49
    %53 = vset.pattern.permute.xlu0 0
    %54 = vperm.xlu0 %53, %v40
    %v55 = vpop.permute.xlu0 %54
    %58 = vset.pattern.permute.xlu0 0
    %59 = vperm.xlu0 %58, %v41
    %v60 = vpop.permute.xlu0 %59
    %63 = vset.pattern.permute.xlu0 0
    %64 = vperm.xlu0 %63, %v42
    %v65 = vpop.permute.xlu0 %64
    %68 = vset.pattern.permute.xlu0 0
    %69 = vperm.xlu0 %68, %v43
    %v70 = vpop.permute.xlu0 %69
    %73 = vset.pattern.permute.xlu0 0
    %74 = vperm.xlu0 %73, %v44
    %v75 = vpop.permute.xlu0 %74
    %78 = vset.pattern.permute.xlu0 0
    %79 = vperm.xlu0 %78, %v45
    %v80 = vpop.permute.xlu0 %79
    %83 = vset.pattern.permute.xlu0 0
    %84 = vperm.xlu0 %83, %v46
    %v85 = vpop.permute.xlu0 %84
    %v95 = vunpack.c.l.b16 %v31
    %v96 = vunpack.c.l.b16 %v32
    %v97 = vunpack.c.l.b16 %v33
    %v98 = vunpack.c.l.b16 %v34
    %v99 = vunpack.c.l.b16 %v35
    %v100 = vunpack.c.l.b16 %v36
    %v101 = vunpack.c.l.b16 %v37
    %v102 = vunpack.c.l.b16 %v38
    %v103 = vpack.c.b16 %v96, %v95
    %v104 = vpack.c.b16 %v98, %v97
    %v105 = vpack.c.b16 %v100, %v99
    %v106 = vpack.c.b16 %v102, %v101
    %v110 = vunpack.c.l.b16 %v28
    %v111 = vunpack.c.l.b16 %v29
    %v112 = vunpack.c.l.b16 %v30
    %v113 = vpack.c.b16 %v111, %v110
    %v114 = vpack.c.b16 %v112, %v112
    %vm116 = vcmask 162816
    %v118 = vsel %vm116, %v103, 0
    %v121 = vsel %vm116, %v104, 0
    %v124 = vsel %vm116, %v105, 0
    %v127 = vsel %vm116, %v106, 0
    %vm129 = vcmask 1041408
    %v131 = vsel %vm129, %v114, 0
    %133 = vmatprep.subr.bf16.mxu0 0
    %134 = vmatpush1.bf16.msra.mxu0 0
    %135 = vmatprep.subr.bf16.mxu0 0
    %136 = vmatpush1.bf16.msra.mxu0 0
    %137 = vmatprep.subr.bf16.mxu0 0
    %138 = vmatpush1.bf16.msra.mxu0 0
    %139 = vmatprep.subr.bf16.mxu0 0
    %140 = vmatpush1.bf16.msra.mxu0 0
    %141 = vmatprep.subr.bf16.mxu0 0
    %142 = vmatpush1.bf16.msra.mxu0 0
    %143 = vmatprep.subr.bf16.mxu0 0
    %144 = vmatpush1.bf16.msra.mxu0 0
    %145 = vmatprep.subr.bf16.mxu0 0
    %146 = vmatpush1.bf16.msra.mxu0 %v131
    %147 = vmatprep.subr.bf16.mxu0 0
    %148 = vmatpush1.bf16.msra.mxu0 %v113
    %149 = vmatprep.subr.bf16.mxu0 0
    %150 = vmatpush2.bf16.msra.mxu0 0
    %151 = vmatprep.subr.bf16.mxu0 0
    %152 = vmatpush2.bf16.msra.mxu0 0
    %153 = vmatprep.subr.bf16.mxu0 0
    %154 = vmatpush2.bf16.msra.mxu0 0
    %155 = vmatprep.subr.bf16.mxu0 0
    %156 = vmatpush2.bf16.msra.mxu0 0
    %157 = vmatprep.subr.bf16.mxu0 0
    %158 = vmatpush2.bf16.msra.mxu0 0
    %159 = vmatprep.subr.bf16.mxu0 0
    %160 = vmatpush2.bf16.msra.mxu0 0
    %161 = vmatprep.subr.bf16.mxu0 0
    %162 = vmatpush2.bf16.msra.mxu0 0
    %163 = vmatprep.subr.bf16.mxu0 0
    %164 = vmatpush2.bf16.msra.mxu0 0
    %165 = vmatprep.mubr.bf16.mxu0 0
    %166 = vmatmul.mubr.bf16.gmra.mxu0 %v118
    %v167 = vpop.f32.mrf.mxu0
    %v168 = vadd.f32 %v50, %v167
    %v169 = vpop.f32.mrf.mxu0
    %v170 = vpop.f32.mrf.mxu0
    %v171 = vadd.f32 %v55, %v170
    %v172 = vpop.f32.mrf.mxu0
    %173 = vmatprep.mubr.bf16.mxu0 0
    %174 = vmatmul.mubr.bf16.gmra.mxu0 %v121
    %v175 = vpop.f32.mrf.mxu0
    %v176 = vadd.f32 %v60, %v175
    %v177 = vpop.f32.mrf.mxu0
    %v178 = vpop.f32.mrf.mxu0
    %v179 = vadd.f32 %v65, %v178
    %v180 = vpop.f32.mrf.mxu0
    %181 = vmatprep.mubr.bf16.mxu0 0
    %182 = vmatmul.mubr.bf16.gmra.mxu0 %v124
    %v183 = vpop.f32.mrf.mxu0
    %v184 = vadd.f32 %v70, %v183
    %v185 = vpop.f32.mrf.mxu0
    %v186 = vpop.f32.mrf.mxu0
    %v187 = vadd.f32 %v75, %v186
    %v188 = vpop.f32.mrf.mxu0
    %189 = vmatprep.mubr.bf16.mxu0 0
    %190 = vmatmul.mubr.bf16.gmra.mxu0 %v127
    %v191 = vpop.f32.mrf.mxu0
    %v192 = vadd.f32 %v80, %v191
    %v193 = vpop.f32.mrf.mxu0
    %v194 = vpop.f32.mrf.mxu0
    %v195 = vadd.f32 %v85, %v194
    %v196 = vpop.f32.mrf.mxu0
    %197 = vdwg.mxu0
    %v198 = vmax.f32 %v168, 0.0
    %v199 = vmax.f32 %v171, 0.0
    %v200 = vmax.f32 %v176, 0.0
    %v201 = vmax.f32 %v179, 0.0
    %v202 = vmax.f32 %v184, 0.0
    %v203 = vmax.f32 %v187, 0.0
    %v204 = vmax.f32 %v192, 0.0
    %v205 = vmax.f32 %v195, 0.0
    %v206 = vpack.c.bf16 %v199, %v198
    %v207 = vpack.c.bf16 %v201, %v200
    %v208 = vpack.c.bf16 %v203, %v202
    %v209 = vpack.c.bf16 %v205, %v204
    %v210 = vld [vmem:[%s3] sm:$0xf]
    %v211 = vld [vmem:[%s3 + $0x4] sm:$0xf]
    %v212 = vld [vmem:[%s3 + $0x8] sm:$0xf]
    %v213 = vld [vmem:[%s3 + $0xc] sm:$0xf]
    %v214 = vld [vmem:[%s3 + $0x10] sm:$0xf]
    %v215 = vld [vmem:[%s3 + $0x14] sm:$0xf]
    %v216 = vld [vmem:[%s3 + $0x18] sm:$0xf]
    %v217 = vld [vmem:[%s3 + $0x1c] sm:$0xf]
    %v218 = vld [vmem:[%s3 + $0x20] sm:$0xf]
    %v219 = vld [vmem:[%s3 + $0x24] sm:$0xf]
    %v220 = vld [vmem:[%s3 + $0x28] sm:$0xf]
    %v221 = vld [vmem:[%s3 + $0x2c] sm:$0xf]
    %v222 = vld [vmem:[%s3 + $0x30] sm:$0xf]
    %v223 = vld [vmem:[%s3 + $0x34] sm:$0xf]
    %v224 = vld [vmem:[%s3 + $0x38] sm:$0xf]
    %v225 = vld [vmem:[%s3 + $0x3c] sm:$0xf]
    %v226 = vld [vmem:[%s4] sm:$0xff]
    %v227 = vld [vmem:[%s4 + $0x8] sm:$0xff]
    %v228 = vld [vmem:[%s4 + $0x10] sm:$0xff]
    %v229 = vld [vmem:[%s4 + $0x18] sm:$0xff]
    %v230 = vld [vmem:[%s4 + $0x20] sm:$0xff]
    %v231 = vld [vmem:[%s4 + $0x28] sm:$0xff]
    %v232 = vld [vmem:[%s4 + $0x30] sm:$0xff]
    %v233 = vld [vmem:[%s4 + $0x38] sm:$0xff]
    %v234 = vld [vmem:[%s4 + $0x40] sm:$0xff]
    %v235 = vld [vmem:[%s4 + $0x48] sm:$0xff]
    %v236 = vld [vmem:[%s4 + $0x50] sm:$0xff]
    %v237 = vld [vmem:[%s4 + $0x58] sm:$0xff]
    %v238 = vld [vmem:[%s4 + $0x60] sm:$0xff]
    %v239 = vld [vmem:[%s4 + $0x68] sm:$0xff]
    %v240 = vld [vmem:[%s4 + $0x70] sm:$0xff]
    %v241 = vld [vmem:[%s4 + $0x78] sm:$0xff]
    %243 = vset.pattern.permute.xlu0 0
    %244 = vperm.xlu0 %243, %v226
    %v245 = vpop.permute.xlu0 %244
    %248 = vset.pattern.permute.xlu0 0
    %249 = vperm.xlu0 %248, %v227
    %v250 = vpop.permute.xlu0 %249
    %253 = vset.pattern.permute.xlu0 0
    %254 = vperm.xlu0 %253, %v228
    %v255 = vpop.permute.xlu0 %254
    %258 = vset.pattern.permute.xlu0 0
    %259 = vperm.xlu0 %258, %v229
    %v260 = vpop.permute.xlu0 %259
    %263 = vset.pattern.permute.xlu0 0
    %264 = vperm.xlu0 %263, %v230
    %v265 = vpop.permute.xlu0 %264
    %268 = vset.pattern.permute.xlu0 0
    %269 = vperm.xlu0 %268, %v231
    %v270 = vpop.permute.xlu0 %269
    %273 = vset.pattern.permute.xlu0 0
    %274 = vperm.xlu0 %273, %v232
    %v275 = vpop.permute.xlu0 %274
    %278 = vset.pattern.permute.xlu0 0
    %279 = vperm.xlu0 %278, %v233
    %v280 = vpop.permute.xlu0 %279
    %283 = vset.pattern.permute.xlu0 0
    %284 = vperm.xlu0 %283, %v234
    %v285 = vpop.permute.xlu0 %284
    %288 = vset.pattern.permute.xlu0 0
    %289 = vperm.xlu0 %288, %v235
    %v290 = vpop.permute.xlu0 %289
    %293 = vset.pattern.permute.xlu0 0
    %294 = vperm.xlu0 %293, %v236
    %v295 = vpop.permute.xlu0 %294
    %298 = vset.pattern.permute.xlu0 0
    %299 = vperm.xlu0 %298, %v237
    %v300 = vpop.permute.xlu0 %299
    %303 = vset.pattern.permute.xlu0 0
    %304 = vperm.xlu0 %303, %v238
    %v305 = vpop.permute.xlu0 %304
    %308 = vset.pattern.permute.xlu0 0
    %309 = vperm.xlu0 %308, %v239
    %v310 = vpop.permute.xlu0 %309
    %313 = vset.pattern.permute.xlu0 0
    %314 = vperm.xlu0 %313, %v240
    %v315 = vpop.permute.xlu0 %314
    %318 = vset.pattern.permute.xlu0 0
    %319 = vperm.xlu0 %318, %v241
    %v320 = vpop.permute.xlu0 %319
    %v338 = vunpack.c.l.b16 %v210
    %v339 = vunpack.c.l.b16 %v211
    %v340 = vunpack.c.l.b16 %v212
    %v341 = vunpack.c.l.b16 %v213
    %v342 = vunpack.c.l.b16 %v214
    %v343 = vunpack.c.l.b16 %v215
    %v344 = vunpack.c.l.b16 %v216
    %v345 = vunpack.c.l.b16 %v217
    %v346 = vunpack.c.l.b16 %v218
    %v347 = vunpack.c.l.b16 %v219
    %v348 = vunpack.c.l.b16 %v220
    %v349 = vunpack.c.l.b16 %v221
    %v350 = vunpack.c.l.b16 %v222
    %v351 = vunpack.c.l.b16 %v223
    %v352 = vunpack.c.l.b16 %v224
    %v353 = vunpack.c.l.b16 %v225
    %v354 = vpack.c.b16 %v339, %v338
    %v355 = vpack.c.b16 %v341, %v340
    %v356 = vpack.c.b16 %v343, %v342
    %v357 = vpack.c.b16 %v345, %v344
    %v358 = vpack.c.b16 %v347, %v346
    %v359 = vpack.c.b16 %v349, %v348
    %v360 = vpack.c.b16 %v351, %v350
    %v361 = vpack.c.b16 %v353, %v352
    %vm362 = vcmask 523264
    %v364 = vsel %vm362, %v354, 0
    %v367 = vsel %vm362, %v355, 0
    %v370 = vsel %vm362, %v356, 0
    %v373 = vsel %vm362, %v357, 0
    %v376 = vsel %vm362, %v358, 0
    %v379 = vsel %vm362, %v359, 0
    %v382 = vsel %vm362, %v360, 0
    %v385 = vsel %vm362, %v361, 0
    %387 = vmatprep.subr.bf16.mxu0 0
    %388 = vmatpush1.bf16.msra.mxu0 0
    %389 = vmatprep.subr.bf16.mxu0 0
    %390 = vmatpush1.bf16.msra.mxu0 0
    %391 = vmatprep.subr.bf16.mxu0 0
    %392 = vmatpush1.bf16.msra.mxu0 0
    %393 = vmatprep.subr.bf16.mxu0 0
    %394 = vmatpush1.bf16.msra.mxu0 0
    %395 = vmatprep.subr.bf16.mxu0 0
    %396 = vmatpush1.bf16.msra.mxu0 %v209
    %397 = vmatprep.subr.bf16.mxu0 0
    %398 = vmatpush1.bf16.msra.mxu0 %v208
    %399 = vmatprep.subr.bf16.mxu0 0
    %400 = vmatpush1.bf16.msra.mxu0 %v207
    %401 = vmatprep.subr.bf16.mxu0 0
    %402 = vmatpush1.bf16.msra.mxu0 %v206
    %403 = vmatprep.subr.bf16.mxu0 0
    %404 = vmatpush2.bf16.msra.mxu0 0
    %405 = vmatprep.subr.bf16.mxu0 0
    %406 = vmatpush2.bf16.msra.mxu0 0
    %407 = vmatprep.subr.bf16.mxu0 0
    %408 = vmatpush2.bf16.msra.mxu0 0
    %409 = vmatprep.subr.bf16.mxu0 0
    %410 = vmatpush2.bf16.msra.mxu0 0
    %411 = vmatprep.subr.bf16.mxu0 0
    %412 = vmatpush2.bf16.msra.mxu0 0
    %413 = vmatprep.subr.bf16.mxu0 0
    %414 = vmatpush2.bf16.msra.mxu0 0
    %415 = vmatprep.subr.bf16.mxu0 0
    %416 = vmatpush2.bf16.msra.mxu0 0
    %417 = vmatprep.subr.bf16.mxu0 0
    %418 = vmatpush2.bf16.msra.mxu0 0
    %419 = vmatprep.mubr.bf16.mxu0 0
    %420 = vmatmul.mubr.bf16.gmra.mxu0 %v364
    %v421 = vpop.f32.mrf.mxu0
    %v422 = vadd.f32 %v245, %v421
    %v423 = vpop.f32.mrf.mxu0
    %v424 = vpop.f32.mrf.mxu0
    %v425 = vadd.f32 %v250, %v424
    %v426 = vpop.f32.mrf.mxu0
    %427 = vmatprep.mubr.bf16.mxu0 0
    %428 = vmatmul.mubr.bf16.gmra.mxu0 %v367
    %v429 = vpop.f32.mrf.mxu0
    %v430 = vadd.f32 %v255, %v429
    %v431 = vpop.f32.mrf.mxu0
    %v432 = vpop.f32.mrf.mxu0
    %v433 = vadd.f32 %v260, %v432
    %v434 = vpop.f32.mrf.mxu0
    %435 = vmatprep.mubr.bf16.mxu0 0
    %436 = vmatmul.mubr.bf16.gmra.mxu0 %v370
    %v437 = vpop.f32.mrf.mxu0
    %v438 = vadd.f32 %v265, %v437
    %v439 = vpop.f32.mrf.mxu0
    %v440 = vpop.f32.mrf.mxu0
    %v441 = vadd.f32 %v270, %v440
    %v442 = vpop.f32.mrf.mxu0
    %443 = vmatprep.mubr.bf16.mxu0 0
    %444 = vmatmul.mubr.bf16.gmra.mxu0 %v373
    %v445 = vpop.f32.mrf.mxu0
    %v446 = vadd.f32 %v275, %v445
    %v447 = vpop.f32.mrf.mxu0
    %v448 = vpop.f32.mrf.mxu0
    %v449 = vadd.f32 %v280, %v448
    %v450 = vpop.f32.mrf.mxu0
    %451 = vmatprep.mubr.bf16.mxu0 0
    %452 = vmatmul.mubr.bf16.gmra.mxu0 %v376
    %v453 = vpop.f32.mrf.mxu0
    %v454 = vadd.f32 %v285, %v453
    %v455 = vpop.f32.mrf.mxu0
    %v456 = vpop.f32.mrf.mxu0
    %v457 = vadd.f32 %v290, %v456
    %v458 = vpop.f32.mrf.mxu0
    %459 = vmatprep.mubr.bf16.mxu0 0
    %460 = vmatmul.mubr.bf16.gmra.mxu0 %v379
    %v461 = vpop.f32.mrf.mxu0
    %v462 = vadd.f32 %v295, %v461
    %v463 = vpop.f32.mrf.mxu0
    %v464 = vpop.f32.mrf.mxu0
    %v465 = vadd.f32 %v300, %v464
    %v466 = vpop.f32.mrf.mxu0
    %467 = vmatprep.mubr.bf16.mxu0 0
    %468 = vmatmul.mubr.bf16.gmra.mxu0 %v382
    %v469 = vpop.f32.mrf.mxu0
    %v470 = vadd.f32 %v305, %v469
    %v471 = vpop.f32.mrf.mxu0
    %v472 = vpop.f32.mrf.mxu0
    %v473 = vadd.f32 %v310, %v472
    %v474 = vpop.f32.mrf.mxu0
    %475 = vmatprep.mubr.bf16.mxu0 0
    %476 = vmatmul.mubr.bf16.gmra.mxu0 %v385
    %v477 = vpop.f32.mrf.mxu0
    %v478 = vadd.f32 %v315, %v477
    %v479 = vpop.f32.mrf.mxu0
    %v480 = vpop.f32.mrf.mxu0
    %v481 = vadd.f32 %v320, %v480
    %v482 = vpop.f32.mrf.mxu0
    %483 = vdwg.mxu0
    %v484 = vmax.f32 %v422, 0.0
    %v485 = vmax.f32 %v425, 0.0
    %v486 = vmax.f32 %v430, 0.0
    %v487 = vmax.f32 %v433, 0.0
    %v488 = vmax.f32 %v438, 0.0
    %v489 = vmax.f32 %v441, 0.0
    %v490 = vmax.f32 %v446, 0.0
    %v491 = vmax.f32 %v449, 0.0
    %v492 = vmax.f32 %v454, 0.0
    %v493 = vmax.f32 %v457, 0.0
    %v494 = vmax.f32 %v462, 0.0
    %v495 = vmax.f32 %v465, 0.0
    %v496 = vmax.f32 %v470, 0.0
    %v497 = vmax.f32 %v473, 0.0
    %v498 = vmax.f32 %v478, 0.0
    %v499 = vmax.f32 %v481, 0.0
    %v500 = vpack.c.bf16 %v485, %v484
    %v501 = vpack.c.bf16 %v487, %v486
    %v502 = vpack.c.bf16 %v489, %v488
    %v503 = vpack.c.bf16 %v491, %v490
    %v504 = vpack.c.bf16 %v493, %v492
    %v505 = vpack.c.bf16 %v495, %v494
    %v506 = vpack.c.bf16 %v497, %v496
    %v507 = vpack.c.bf16 %v499, %v498
    %v508 = vld [vmem:[%s5] sm:$0x3]
    %v509 = vld [vmem:[%s6] sm:$0xf]
    %511 = vset.pattern.permute.xlu0 0
    %512 = vperm.xlu0 %511, %v509
    %v513 = vpop.permute.xlu0 %512
    %515 = vmatprep.subr.bf16.mxu0 0
    %516 = vmatpush1.bf16.msra.mxu0 %v507
    %517 = vmatprep.subr.bf16.mxu0 0
    %518 = vmatpush1.bf16.msra.mxu0 %v506
    %519 = vmatprep.subr.bf16.mxu0 0
    %520 = vmatpush1.bf16.msra.mxu0 %v505
    %521 = vmatprep.subr.bf16.mxu0 0
    %522 = vmatpush1.bf16.msra.mxu0 %v504
    %523 = vmatprep.subr.bf16.mxu0 0
    %524 = vmatpush1.bf16.msra.mxu0 %v503
    %525 = vmatprep.subr.bf16.mxu0 0
    %526 = vmatpush1.bf16.msra.mxu0 %v502
    %527 = vmatprep.subr.bf16.mxu0 0
    %528 = vmatpush1.bf16.msra.mxu0 %v501
    %529 = vmatprep.subr.bf16.mxu0 0
    %530 = vmatpush1.bf16.msra.mxu0 %v500
    %531 = vmatprep.subr.bf16.mxu0 0
    %532 = vmatpush2.bf16.msra.mxu0 0
    %533 = vmatprep.subr.bf16.mxu0 0
    %534 = vmatpush2.bf16.msra.mxu0 0
    %535 = vmatprep.subr.bf16.mxu0 0
    %536 = vmatpush2.bf16.msra.mxu0 0
    %537 = vmatprep.subr.bf16.mxu0 0
    %538 = vmatpush2.bf16.msra.mxu0 0
    %539 = vmatprep.subr.bf16.mxu0 0
    %540 = vmatpush2.bf16.msra.mxu0 0
    %541 = vmatprep.subr.bf16.mxu0 0
    %542 = vmatpush2.bf16.msra.mxu0 0
    %543 = vmatprep.subr.bf16.mxu0 0
    %544 = vmatpush2.bf16.msra.mxu0 0
    %545 = vmatprep.subr.bf16.mxu0 0
    %546 = vmatpush2.bf16.msra.mxu0 0
    %547 = vmatprep.mubr.bf16.mxu0 0
    %548 = vmatmul.mubr.bf16.gmra.mxu0 %v508
    %v549 = vpop.f32.mrf.mxu0
    %v550 = vadd.f32 %v513, %v549
    %v551 = vpop.f32.mrf.mxu0
    %v552 = vpop.f32.mrf.mxu0
    %v553 = vpop.f32.mrf.mxu0
    %554 = vdwg.mxu0
    %555 = vst [vmem:[#allocation2] sm:$0xf] %v550
    // Predicated region
    $region30: #{tpu_custom_call.1} parent=1 // pred_check
      _
    $region31: #{tpu_custom_call.1} parent=1 // pred_check_branch
      %557 = sbr.rel (0) target = $region33
    $region32: #{tpu_custom_call.1} parent=1 // pred_region
      %s559 = ssub.s32 64, 64
      %560 = vsyncadd [#allocation3], %s559
      %s562 = sshll.u32 [#allocation2], 4
      %s563 = int_to_ptr.vmem [resolvable:$true] %s562
      %565 = dma.vmem_to_hbm [thread:$0]  %s563, 64, %s7, [#allocation3]
    $region33: #{tpu_custom_call.1} parent=1 // pred_fallthru
      _
    // Predicated region
    $region34: #{tpu_custom_call.1} parent=1 // pred_check
      _
    $region35: #{tpu_custom_call.1} parent=1 // pred_check_branch
      %567 = sbr.rel (0) target = $region37
    $region36: #{tpu_custom_call.1} parent=1 // pred_region
      %568 = dma.done [#allocation3], 64
    $region37: #{tpu_custom_call.1} parent=1 // pred_fallthru
      _
    %569 = vsyncpa [#allocation3], 1

</llo_original>
